<compile_context>
chip_gen: v6e
topology: v6e:2x2x1
jax: 0.10.0
libtpu: 0.0.40
codegen_flags: <defaults>
</compile_context>

<pallas_src>
import jax
import jax.numpy as jnp
from jax.experimental import pallas as pl
from jax.experimental.pallas import tpu as pltpu

# ----- hyperparameters (a small, deterministic instantiation of `hp`) -------
INPUT_SHAPE = 32            # input_shape
LAYER_SHAPES = (64, 64)     # hp.layer_shapes  (hp.n_layers = 2)
OUTPUT_SHAPE = 16           # output_shape
MIN_VAL = -1.0              # min_val for torch.clamp
MAX_VAL = 1.0               # max_val for torch.clamp

LANE = 128                  # TPU lane width: VMEM-resident hidden dims padded to this
SUBLANE = 8                 # sublane granularity for the batch axis
MAX_BATCH_TILE = 2048       # rows per grid step for very large batches
SMALL_BATCH_FALLBACK = 64   # below this, plain XLA beats a custom call


def _round_up(n, m):
    return ((n + m - 1) // m) * m


def _pad2(a, rows, cols):
    """Zero-pad a 2-D array up to (rows, cols)."""
    r, c = a.shape
    return jnp.pad(a, ((0, rows - r), (0, cols - c)))


def _mlp_kernel(x_ref, w1_ref, b1_ref, w2_ref, b2_ref, w3_ref, b3_ref, o_ref):
    """Fused MLP: (Linear+ReLU) x2 -> Linear -> clamp, all in VMEM.

    Hidden feature dims are pre-padded (once, in prepare_params) to 128 lanes
    with zeros, which is numerically inert through matmul / bias-add / ReLU.
    The HBM-facing input (32) and output (16) dims stay at natural width so
    the dominant DMA streams stay narrow.
    """
    x = x_ref[...]
    w1 = w1_ref[...]
    w2 = w2_ref[...]
    w3 = w3_ref[...]

    h = jnp.dot(x, w1, preferred_element_type=jnp.float32)
    h = jnp.maximum(h + b1_ref[...].astype(jnp.float32), 0.0)

    h = jnp.dot(h.astype(w2.dtype), w2, preferred_element_type=jnp.float32)
    h = jnp.maximum(h + b2_ref[...].astype(jnp.float32), 0.0)

    y = jnp.dot(h.astype(w3.dtype), w3, preferred_element_type=jnp.float32)
    y = y + b3_ref[...].astype(jnp.float32)
    o_ref[...] = jnp.clip(y, MIN_VAL, MAX_VAL).astype(o_ref.dtype)


def prepare_params(params):
    """Pad weights/biases ONCE, outside the hot path.

    Only the VMEM-resident hidden dims are padded to 128 lanes; the HBM-facing
    input (32) / output (16) dims keep their natural widths.  Cast the result
    to bf16 on v6e/v7x if the caller also feeds bf16 activations.
    """
    h1p = _round_up(LAYER_SHAPES[0], LANE)
    h2p = _round_up(LAYER_SHAPES[1], LANE)
    return {
        "w1": _pad2(params["w1"], INPUT_SHAPE, h1p),
        "b1": _pad2(params["b1"], 1, h1p),
        "w2": _pad2(params["w2"], h1p, h2p),
        "b2": _pad2(params["b2"], 1, h2p),
        "w3": _pad2(params["w3"], h2p, OUTPUT_SHAPE),
        "b3": _pad2(params["b3"], 1, OUTPUT_SHAPE),
    }


def _select_batch_tile(batch):
    """Rows per grid step.

    Big enough to amortize the ~0.35us/step overhead, but capped at roughly
    half the (sublane-rounded) batch so the grid keeps >=2 "parallel" steps
    (v7x has 2 TensorCores sharing the parallel grid axis).
    """
    b8 = _round_up(batch, SUBLANE)
    half = _round_up(pl.cdiv(b8, 2), SUBLANE)
    return max(SUBLANE, min(MAX_BATCH_TILE, half))


def _xla_forward(x, pp):
    """Plain-XLA path for tiny batches (custom-call dispatch dominates there)."""
    h = jnp.maximum(
        jnp.dot(x, pp["w1"], preferred_element_type=jnp.float32) + pp["b1"], 0.0)
    h = jnp.maximum(
        jnp.dot(h.astype(pp["w2"].dtype), pp["w2"],
                preferred_element_type=jnp.float32) + pp["b2"], 0.0)
    y = jnp.dot(h.astype(pp["w3"].dtype), pp["w3"],
                preferred_element_type=jnp.float32) + pp["b3"]
    return jnp.clip(y, MIN_VAL, MAX_VAL).astype(x.dtype)


def context_nn_forward(x, prepared_params, *, force_pallas=False):
    """x: [B, INPUT_SHAPE].  prepared_params: output of prepare_params().

    Feed bf16 x / bf16 prepared params on v6e/v7x to halve the HBM streams
    (accumulation stays f32 either way); keep f32 on v5e.
    """
    B, F = x.shape
    assert F == INPUT_SHAPE
    pp = prepared_params

    if B < SMALL_BATCH_FALLBACK and not force_pallas:
        return _xla_forward(x, pp)

    tile = _select_batch_tile(B)
    grid = (pl.cdiv(B, tile),)

    h1p = pp["w1"].shape[1]
    h2p = pp["w2"].shape[1]
    itemsize = jnp.dtype(x.dtype).itemsize
    flops = 2 * B * (INPUT_SHAPE * h1p + h1p * h2p + h2p * OUTPUT_SHAPE)
    bytes_accessed = itemsize * (
        B * INPUT_SHAPE + B * OUTPUT_SHAPE
        + INPUT_SHAPE * h1p + h1p
        + h1p * h2p + h2p
        + h2p * OUTPUT_SHAPE + OUTPUT_SHAPE)

    def resident(arr):
        # Whole (small) parameter array with a constant block index: the
        # pipeline only DMAs it once across the batch grid.
        return pl.BlockSpec(arr.shape, lambda i: (0, 0))

    out = pl.pallas_call(
        _mlp_kernel,
        out_shape=jax.ShapeDtypeStruct((B, OUTPUT_SHAPE), x.dtype),
        grid_spec=pltpu.PrefetchScalarGridSpec(
            num_scalar_prefetch=0,
            grid=grid,
            in_specs=[
                pl.BlockSpec((tile, INPUT_SHAPE), lambda i: (i, 0)),  # x tile
                resident(pp["w1"]), resident(pp["b1"]),
                resident(pp["w2"]), resident(pp["b2"]),
                resident(pp["w3"]), resident(pp["b3"]),
            ],
            out_specs=pl.BlockSpec((tile, OUTPUT_SHAPE), lambda i: (i, 0)),
        ),
        compiler_params=pltpu.CompilerParams(
            dimension_semantics=("parallel",)),
        cost_estimate=pl.CostEstimate(
            flops=flops, transcendentals=0, bytes_accessed=bytes_accessed),
    )(x, pp["w1"], pp["b1"], pp["w2"], pp["b2"], pp["w3"], pp["b3"])

    # OOB rows of the partial last block were masked on store; output already
    # has the exact (B, OUTPUT_SHAPE) shape -- no slicing needed.
    return out


def init_params(key):
    """Deterministic parameter init mirroring the nn.Linear shapes."""
    dims = (INPUT_SHAPE,) + LAYER_SHAPES + (OUTPUT_SHAPE,)
    params = {}
    for li in range(len(dims) - 1):
        key, kw, kb = jax.random.split(key, 3)
        fan_in, fan_out = dims[li], dims[li + 1]
        bound = 1.0 / jnp.sqrt(fan_in)
        # stored as [in, out] (transpose of PyTorch's [out, in])
        params[f"w{li + 1}"] = jax.random.uniform(
            kw, (fan_in, fan_out), jnp.float32, -bound, bound)
        params[f"b{li + 1}"] = jax.random.uniform(
            kb, (1, fan_out), jnp.float32, -bound, bound)
    return params


def reference_forward(x, params):
    h = jnp.maximum(x @ params["w1"] + params["b1"], 0.0)
    h = jnp.maximum(h @ params["w2"] + params["b2"], 0.0)
    y = h @ params["w3"] + params["b3"]
    return jnp.clip(y, MIN_VAL, MAX_VAL)


if __name__ == "__main__":
    key = jax.random.PRNGKey(0)
    key, kx1, kx2, kx3 = jax.random.split(key, 4)
    params = init_params(key)
    pp = prepare_params(params)   # hoisted: pad weights/biases exactly once

    # 1. Tiny batch -> plain-XLA fallback path.
    x_small = jax.random.normal(kx1, (8, INPUT_SHAPE), jnp.float32)
    out_small = jax.block_until_ready(context_nn_forward(x_small, pp))
    assert out_small.shape == (8, OUTPUT_SHAPE)
    assert jnp.allclose(out_small, reference_forward(x_small, params),
                        atol=1e-5, rtol=1e-5)

    # 2. Ragged batch, Pallas path forced (exercises the partial last block:
    #    tile=8, grid=2, rows 13..15 masked on store).
    x_rag = jax.random.normal(kx2, (13, INPUT_SHAPE), jnp.float32)
    out_rag = jax.block_until_ready(
        context_nn_forward(x_rag, pp, force_pallas=True))
    assert out_rag.shape == (13, OUTPUT_SHAPE)
    assert jnp.allclose(out_rag, reference_forward(x_rag, params),
                        atol=1e-5, rtol=1e-5)

    # 3. Larger ragged batch -> Pallas path with 2 parallel grid steps
    #    (tile=152, grid=2) and a masked tail.
    x_big = jax.random.normal(kx3, (300, INPUT_SHAPE), jnp.float32)
    out_big = jax.block_until_ready(context_nn_forward(x_big, pp))
    assert out_big.shape == (300, OUTPUT_SHAPE)
    assert jnp.allclose(out_big, reference_forward(x_big, params),
                        atol=1e-5, rtol=1e-5)

    print("KERNEL_OK")
</pallas_src>

<mosaic_0001>
module attributes {stable_mosaic.version = 11 : i64} {
  func.func @_mlp_kernel(%arg0: i32, %arg1: memref<8x32xf32, #tpu.memory_space<vmem>>, %arg2: memref<32x128xf32, #tpu.memory_space<vmem>>, %arg3: memref<1x128xf32, #tpu.memory_space<vmem>>, %arg4: memref<128x128xf32, #tpu.memory_space<vmem>>, %arg5: memref<1x128xf32, #tpu.memory_space<vmem>>, %arg6: memref<128x16xf32, #tpu.memory_space<vmem>>, %arg7: memref<1x16xf32, #tpu.memory_space<vmem>>, %arg8: memref<8x16xf32, #tpu.memory_space<vmem>>) attributes {dimension_semantics = [#tpu.dimension_semantics<parallel>], iteration_bounds = array<i64: 2>, scalar_prefetch = 0 : i64, scratch_operands = 0 : i64, tpu.core_type = #tpu.core_type<tc>, window_params = [{transform_indices = @transform_0, window_bounds = array<i64: 8, 32>}, {pipeline_mode = #tpu.pipeline_mode<synchronous>, transform_indices = @transform_1, window_bounds = array<i64: 32, 128>}, {pipeline_mode = #tpu.pipeline_mode<synchronous>, transform_indices = @transform_2, window_bounds = array<i64: 1, 128>}, {pipeline_mode = #tpu.pipeline_mode<synchronous>, transform_indices = @transform_3, window_bounds = array<i64: 128, 128>}, {pipeline_mode = #tpu.pipeline_mode<synchronous>, transform_indices = @transform_4, window_bounds = array<i64: 1, 128>}, {pipeline_mode = #tpu.pipeline_mode<synchronous>, transform_indices = @transform_5, window_bounds = array<i64: 128, 16>}, {pipeline_mode = #tpu.pipeline_mode<synchronous>, transform_indices = @transform_6, window_bounds = array<i64: 1, 16>}, {transform_indices = @transform_7, window_bounds = array<i64: 8, 16>}]} {
    %c0 = arith.constant 0 : index
    %c0_0 = arith.constant 0 : index
    %0 = vector.load %arg1[%c0, %c0_0] : memref<8x32xf32, #tpu.memory_space<vmem>>, vector<8x32xf32>
    %c0_1 = arith.constant 0 : index
    %c0_2 = arith.constant 0 : index
    %1 = vector.load %arg2[%c0_1, %c0_2] : memref<32x128xf32, #tpu.memory_space<vmem>>, vector<32x128xf32>
    %c0_3 = arith.constant 0 : index
    %c0_4 = arith.constant 0 : index
    %2 = vector.load %arg4[%c0_3, %c0_4] : memref<128x128xf32, #tpu.memory_space<vmem>>, vector<128x128xf32>
    %c0_5 = arith.constant 0 : index
    %c0_6 = arith.constant 0 : index
    %3 = vector.load %arg6[%c0_5, %c0_6] : memref<128x16xf32, #tpu.memory_space<vmem>>, vector<128x16xf32>
    %cst = arith.constant dense<0.000000e+00> : vector<8x128xf32>
    %4 = tpu.matmul %0, %1, %cst {dimension_numbers = #tpu.dot_dimension_numbers<[1], [0], [0], [1], [0, 0, 1, 1], [], []>} : vector<8x32xf32>, vector<32x128xf32>, vector<8x128xf32> -> vector<8x128xf32>
    %c0_7 = arith.constant 0 : index
    %c0_8 = arith.constant 0 : index
    %5 = vector.load %arg3[%c0_7, %c0_8] : memref<1x128xf32, #tpu.memory_space<vmem>>, vector<1x128xf32>
    %6 = vector.broadcast %5 : vector<1x128xf32> to vector<8x128xf32>
    %7 = arith.addf %4, %6 : vector<8x128xf32>
    %cst_9 = arith.constant 0.000000e+00 : f32
    %8 = vector.broadcast %cst_9 : f32 to vector<8x128xf32>
    %9 = arith.maximumf %7, %8 : vector<8x128xf32>
    %cst_10 = arith.constant dense<0.000000e+00> : vector<8x128xf32>
    %10 = tpu.matmul %9, %2, %cst_10 {dimension_numbers = #tpu.dot_dimension_numbers<[1], [0], [0], [1], [0, 0, 1, 1], [], []>} : vector<8x128xf32>, vector<128x128xf32>, vector<8x128xf32> -> vector<8x128xf32>
    %c0_11 = arith.constant 0 : index
    %c0_12 = arith.constant 0 : index
    %11 = vector.load %arg5[%c0_11, %c0_12] : memref<1x128xf32, #tpu.memory_space<vmem>>, vector<1x128xf32>
    %12 = vector.broadcast %11 : vector<1x128xf32> to vector<8x128xf32>
    %13 = arith.addf %10, %12 : vector<8x128xf32>
    %cst_13 = arith.constant 0.000000e+00 : f32
    %14 = vector.broadcast %cst_13 : f32 to vector<8x128xf32>
    %15 = arith.maximumf %13, %14 : vector<8x128xf32>
    %cst_14 = arith.constant dense<0.000000e+00> : vector<8x16xf32>
    %16 = tpu.matmul %15, %3, %cst_14 {dimension_numbers = #tpu.dot_dimension_numbers<[1], [0], [0], [1], [0, 0, 1, 1], [], []>} : vector<8x128xf32>, vector<128x16xf32>, vector<8x16xf32> -> vector<8x16xf32>
    %c0_15 = arith.constant 0 : index
    %c0_16 = arith.constant 0 : index
    %17 = vector.load %arg7[%c0_15, %c0_16] : memref<1x16xf32, #tpu.memory_space<vmem>>, vector<1x16xf32>
    %18 = vector.broadcast %17 : vector<1x16xf32> to vector<8x16xf32>
    %19 = arith.addf %16, %18 : vector<8x16xf32>
    %cst_17 = arith.constant -1.000000e+00 : f32
    %cst_18 = arith.constant 1.000000e+00 : f32
    %20 = vector.broadcast %cst_17 : f32 to vector<8x16xf32>
    %21 = arith.maximumf %20, %19 : vector<8x16xf32>
    %22 = vector.broadcast %cst_18 : f32 to vector<8x16xf32>
    %23 = arith.minimumf %22, %21 : vector<8x16xf32>
    %c0_19 = arith.constant 0 : index
    %c0_20 = arith.constant 0 : index
    %24 = vector.load %arg8[%c0_19, %c0_20] : memref<8x16xf32, #tpu.memory_space<vmem>>, vector<8x16xf32>
    tpu.vector_store %arg8[%c0_19, %c0_20], %23 {strides = array<i32>} : memref<8x16xf32, #tpu.memory_space<vmem>>, vector<8x16xf32>,
    return
  }
  func.func @transform_0(%arg0: i32) -> (i32, i32) {
    %c0_i32 = arith.constant 0 : i32
    %c0_i32_0 = arith.constant 0 : i32
    return %arg0, %c0_i32 : i32, i32
  }
  func.func @transform_1(%arg0: i32) -> (i32, i32) {
    %c0_i32 = arith.constant 0 : i32
    %c0_i32_0 = arith.constant 0 : i32
    %c0_i32_1 = arith.constant 0 : i32
    return %c0_i32, %c0_i32_0 : i32, i32
  }
  func.func @transform_2(%arg0: i32) -> (i32, i32) {
    %c0_i32 = arith.constant 0 : i32
    %c0_i32_0 = arith.constant 0 : i32
    %c0_i32_1 = arith.constant 0 : i32
    return %c0_i32, %c0_i32_0 : i32, i32
  }
  func.func @transform_3(%arg0: i32) -> (i32, i32) {
    %c0_i32 = arith.constant 0 : i32
    %c0_i32_0 = arith.constant 0 : i32
    %c0_i32_1 = arith.constant 0 : i32
    return %c0_i32, %c0_i32_0 : i32, i32
  }
  func.func @transform_4(%arg0: i32) -> (i32, i32) {
    %c0_i32 = arith.constant 0 : i32
    %c0_i32_0 = arith.constant 0 : i32
    %c0_i32_1 = arith.constant 0 : i32
    return %c0_i32, %c0_i32_0 : i32, i32
  }
  func.func @transform_5(%arg0: i32) -> (i32, i32) {
    %c0_i32 = arith.constant 0 : i32
    %c0_i32_0 = arith.constant 0 : i32
    %c0_i32_1 = arith.constant 0 : i32
    return %c0_i32, %c0_i32_0 : i32, i32
  }
  func.func @transform_6(%arg0: i32) -> (i32, i32) {
    %c0_i32 = arith.constant 0 : i32
    %c0_i32_0 = arith.constant 0 : i32
    %c0_i32_1 = arith.constant 0 : i32
    return %c0_i32, %c0_i32_0 : i32, i32
  }
  func.func @transform_7(%arg0: i32) -> (i32, i32) {
    %c0_i32 = arith.constant 0 : i32
    %c0_i32_0 = arith.constant 0 : i32
    return %arg0, %c0_i32 : i32, i32
  }
}

</mosaic_0001>

<llo_original>
// kernel: tpu_custom_call.1
$region0: #{tpu_custom_call.1}
  #allocation0 [shape = 'u32[]', space=smem, size = 0x4, offset = 0x4, fixed_abs, tag = 'smem constant byte address 0x4 - core index']
  #allocation1 [shape = 'u32[144,128]{1,0:T(1,128)}', space=vmem, size = 0x12000, scoped, tag = 'internal scratch']
  %s0 = inlined_call_operand.vmem [shape: f32[13,32], index: 0, kind: input, shape index: {}]
  %s1 = inlined_call_operand.hbm [shape: f32[32,128], index: 1, kind: input, shape index: {}]
  %s2 = inlined_call_operand.vmem [shape: f32[1,128], index: 2, kind: input, shape index: {}]
  %s3 = inlined_call_operand.vmem [shape: f32[128,128], index: 3, kind: input, shape index: {}]
  %s4 = inlined_call_operand.vmem [shape: f32[1,128], index: 4, kind: input, shape index: {}]
  %s5 = inlined_call_operand.vmem [shape: f32[128,16], index: 5, kind: input, shape index: {}]
  %s6 = inlined_call_operand.vmem [shape: f32[1,16], index: 6, kind: input, shape index: {}]
  %s7 = inlined_call_operand.hbm [shape: f32[13,16], index: 7, kind: output, shape index: {}]
  %s8 = sld [smem:[#allocation0]]
  $region65: #{tpu_custom_call.1} parent=0
    _
  %s10 = ssub.s32 1, %s8
  %s11 = scalar_select 0, %s10, %s8
  $region1: #{tpu_custom_call.1} parent=0
    #allocation2 [shape = 'u8[16384]{0}', space=vmem, size = 0x4000, scoped, tag = 'input window, operand 1, single buffered']
    #allocation3 [shape = 's32[2]{0}', space=sflag, size = 0x8, scoped, tag = 'scoped memory for tpu_custom_call.1']
    #allocation4 [shape = 's32[2]{0}', space=sflag, size = 0x8, scoped, tag = 'scoped memory for tpu_custom_call.1']
    #allocation5 [shape = 'u8[8192]{0}', space=vmem, size = 0x2000, scoped, tag = 'output window, operand 0']
    %12 = vsyncpa [#allocation3], 0
    %13 = vsyncpa [#allocation4], 0
    %s14 = scalar_lea.sflag [#allocation4], 1
    %15 = vsyncpa %s14, 0
    loop: start=0, step=1, limit=4
    $region2: #{tpu_custom_call.1} parent=1 // loop_pre_header
      _
    $region3: #{tpu_custom_call.1} parent=1 // loop_header
      %s17 = sphi 0, %s21
      %p18 = scmp.ge.s32.totalorder %s17, 4
      %s27 = sphi 0, %s29
      %s30 = sphi 0, %s27
      %s31 = sphi 0, %s30
      %s47 = sphi 0, %s31
      %s51 = sphi 0, %s51
      %s53 = sphi 0, %s51
      %s54 = sphi 0, %s53
      %s68 = sphi 0, %s54
      %s72 = sphi 0, %s72
      %s74 = sphi 0, %s72
      %s75 = sphi 0, %s74
      %s89 = sphi 0, %s75
      %s93 = sphi 0, %s93
      %s95 = sphi 0, %s93
      %s96 = sphi 0, %s95
      %s110 = sphi 0, %s96
      %s114 = sphi 0, %s114
      %s116 = sphi 0, %s114
      %s117 = sphi 0, %s116
      %s131 = sphi 0, %s117
      %s135 = sphi 0, %s135
      %s137 = sphi 0, %s135
      %s138 = sphi 0, %s137
      %s152 = sphi 0, %s138
      %s156 = sphi 0, %s156
      %s158 = sphi 0, %s156
      %s159 = sphi 0, %s158
      %s173 = sphi 0, %s159
      %s179 = sphi 0, %s181
      %s182 = sphi 0, %s179
      %s183 = sphi 0, %s182
      %s199 = sphi 0, %s183
    $region4: #{tpu_custom_call.1} parent=1 // loop_header_branch
      %20 = sbr.rel (%p18) target = $region8
    $region5: #{tpu_custom_call.1} parent=1 // loop_body
      %s22 = ssub.s32 %s17, 1
      %s23 = ssub.s32 %s17, 2
      %s24 = sadd.s32 %s17, 1
      %s25 = ssub.s32 %s17, %s24
      %p26 = scmp.eq.s32.totalorder %s25, 0
      %s28 = sadd.s32 %s27, 1
      %s29 = scalar_select %p26, %s27, %s28
      %p32 = pneg %p26
      %p33 = scmp.eq.s32.totalorder %s17, 1
      %p34 = por %p32, %p33
      %p35 = scmp.ne.s32.totalorder %s27, %s30
      %p36 = scmp.eq.s32.totalorder %s17, 0
      %p37 = por %p35, %p36
      %p38 = scmp.ne.s32.totalorder %s27, %s30
      %p39 = scmp.eq.s32.totalorder %s22, 1
      %p40 = por %p38, %p39
      %p41 = scmp.ne.s32.totalorder %s30, %s31
      %p42 = scmp.eq.s32.totalorder %s22, 0
      %p43 = por %p41, %p42
      %p44 = scmp.ne.s32.totalorder %s30, %s31
      %p45 = scmp.eq.s32.totalorder %s23, 1
      %p46 = por %p44, %p45
      %p48 = scmp.ne.s32.totalorder %s31, %s47
      %p49 = scmp.eq.s32.totalorder %s23, 0
      %p50 = por %p48, %p49
      %s52 = sadd.s32 %s51, 1
      %p55 = scmp.eq.s32.totalorder %s17, 1
      %p56 = scmp.ne.s32.totalorder %s51, %s53
      %p57 = scmp.eq.s32.totalorder %s17, 0
      %p58 = por %p56, %p57
      %p59 = scmp.ne.s32.totalorder %s51, %s53
      %p60 = scmp.eq.s32.totalorder %s22, 1
      %p61 = por %p59, %p60
      %p62 = scmp.ne.s32.totalorder %s53, %s54
      %p63 = scmp.eq.s32.totalorder %s22, 0
      %p64 = por %p62, %p63
      %p65 = scmp.ne.s32.totalorder %s53, %s54
      %p66 = scmp.eq.s32.totalorder %s23, 1
      %p67 = por %p65, %p66
      %p69 = scmp.ne.s32.totalorder %s54, %s68
      %p70 = scmp.eq.s32.totalorder %s23, 0
      %p71 = por %p69, %p70
      %s73 = sadd.s32 %s72, 1
      %p76 = scmp.eq.s32.totalorder %s17, 1
      %p77 = scmp.ne.s32.totalorder %s72, %s74
      %p78 = scmp.eq.s32.totalorder %s17, 0
      %p79 = por %p77, %p78
      %p80 = scmp.ne.s32.totalorder %s72, %s74
      %p81 = scmp.eq.s32.totalorder %s22, 1
      %p82 = por %p80, %p81
      %p83 = scmp.ne.s32.totalorder %s74, %s75
      %p84 = scmp.eq.s32.totalorder %s22, 0
      %p85 = por %p83, %p84
      %p86 = scmp.ne.s32.totalorder %s74, %s75
      %p87 = scmp.eq.s32.totalorder %s23, 1
      %p88 = por %p86, %p87
      %p90 = scmp.ne.s32.totalorder %s75, %s89
      %p91 = scmp.eq.s32.totalorder %s23, 0
      %p92 = por %p90, %p91
      %s94 = sadd.s32 %s93, 1
      %p97 = scmp.eq.s32.totalorder %s17, 1
      %p98 = scmp.ne.s32.totalorder %s93, %s95
      %p99 = scmp.eq.s32.totalorder %s17, 0
      %p100 = por %p98, %p99
      %p101 = scmp.ne.s32.totalorder %s93, %s95
      %p102 = scmp.eq.s32.totalorder %s22, 1
      %p103 = por %p101, %p102
      %p104 = scmp.ne.s32.totalorder %s95, %s96
      %p105 = scmp.eq.s32.totalorder %s22, 0
      %p106 = por %p104, %p105
      %p107 = scmp.ne.s32.totalorder %s95, %s96
      %p108 = scmp.eq.s32.totalorder %s23, 1
      %p109 = por %p107, %p108
      %p111 = scmp.ne.s32.totalorder %s96, %s110
      %p112 = scmp.eq.s32.totalorder %s23, 0
      %p113 = por %p111, %p112
      %s115 = sadd.s32 %s114, 1
      %p118 = scmp.eq.s32.totalorder %s17, 1
      %p119 = scmp.ne.s32.totalorder %s114, %s116
      %p120 = scmp.eq.s32.totalorder %s17, 0
      %p121 = por %p119, %p120
      %p122 = scmp.ne.s32.totalorder %s114, %s116
      %p123 = scmp.eq.s32.totalorder %s22, 1
      %p124 = por %p122, %p123
      %p125 = scmp.ne.s32.totalorder %s116, %s117
      %p126 = scmp.eq.s32.totalorder %s22, 0
      %p127 = por %p125, %p126
      %p128 = scmp.ne.s32.totalorder %s116, %s117
      %p129 = scmp.eq.s32.totalorder %s23, 1
      %p130 = por %p128, %p129
      %p132 = scmp.ne.s32.totalorder %s117, %s131
      %p133 = scmp.eq.s32.totalorder %s23, 0
      %p134 = por %p132, %p133
      %s136 = sadd.s32 %s135, 1
      %p139 = scmp.eq.s32.totalorder %s17, 1
      %p140 = scmp.ne.s32.totalorder %s135, %s137
      %p141 = scmp.eq.s32.totalorder %s17, 0
      %p142 = por %p140, %p141
      %p143 = scmp.ne.s32.totalorder %s135, %s137
      %p144 = scmp.eq.s32.totalorder %s22, 1
      %p145 = por %p143, %p144
      %p146 = scmp.ne.s32.totalorder %s137, %s138
      %p147 = scmp.eq.s32.totalorder %s22, 0
      %p148 = por %p146, %p147
      %p149 = scmp.ne.s32.totalorder %s137, %s138
      %p150 = scmp.eq.s32.totalorder %s23, 1
      %p151 = por %p149, %p150
      %p153 = scmp.ne.s32.totalorder %s138, %s152
      %p154 = scmp.eq.s32.totalorder %s23, 0
      %p155 = por %p153, %p154
      %s157 = sadd.s32 %s156, 1
      %p160 = scmp.eq.s32.totalorder %s17, 1
      %p161 = scmp.ne.s32.totalorder %s156, %s158
      %p162 = scmp.eq.s32.totalorder %s17, 0
      %p163 = por %p161, %p162
      %p164 = scmp.ne.s32.totalorder %s156, %s158
      %p165 = scmp.eq.s32.totalorder %s22, 1
      %p166 = por %p164, %p165
      %p167 = scmp.ne.s32.totalorder %s158, %s159
      %p168 = scmp.eq.s32.totalorder %s22, 0
      %p169 = por %p167, %p168
      %p170 = scmp.ne.s32.totalorder %s158, %s159
      %p171 = scmp.eq.s32.totalorder %s23, 1
      %p172 = por %p170, %p171
      %p174 = scmp.ne.s32.totalorder %s159, %s173
      %p175 = scmp.eq.s32.totalorder %s23, 0
      %p176 = por %p174, %p175
      %s177 = ssub.s32 %s17, %s24
      %p178 = scmp.eq.s32.totalorder %s177, 0
      %s180 = sadd.s32 %s179, 1
      %s181 = scalar_select %p178, %s179, %s180
      %p184 = pneg %p178
      %p185 = scmp.eq.s32.totalorder %s17, 1
      %p186 = por %p184, %p185
      %p187 = scmp.ne.s32.totalorder %s179, %s182
      %p188 = scmp.eq.s32.totalorder %s17, 0
      %p189 = por %p187, %p188
      %p190 = scmp.ne.s32.totalorder %s179, %s182
      %p191 = scmp.eq.s32.totalorder %s22, 1
      %p192 = por %p190, %p191
      %p193 = scmp.ne.s32.totalorder %s182, %s183
      %p194 = scmp.eq.s32.totalorder %s22, 0
      %p195 = por %p193, %p194
      %p196 = scmp.ne.s32.totalorder %s182, %s183
      %p197 = scmp.eq.s32.totalorder %s23, 1
      %p198 = por %p196, %p197
      %p200 = scmp.ne.s32.totalorder %s183, %s199
      %p201 = scmp.eq.s32.totalorder %s23, 0
      %p202 = por %p200, %p201
      %p203 = scmp.le.s32.totalorder 1, %s17
      %p204 = scmp.lt.s32.totalorder %s17, 3
      %p205 = pnand %p203, %p204
      %p206 = pneg %p205
      // Predicated region
      $region9: #{tpu_custom_call.1} parent=5 // pred_check
        _
      $region10: #{tpu_custom_call.1} parent=5 // pred_check_branch
        %208 = sbr.rel (%p205) target = $region12
      $region11: #{tpu_custom_call.1} parent=5 // pred_region
        %s209 = ssub.s32 %s17, 1
        // Predicated region
        $region13: #{tpu_custom_call.1} parent=11 // pred_check
          %p210 = pneg %p64
        $region14: #{tpu_custom_call.1} parent=11 // pred_check_branch
          %212 = sbr.rel (%p210) target = $region16
        $region15: #{tpu_custom_call.1} parent=11 // pred_region
          %s214 = ssub.s32 512, 512
          %215 = vsyncadd [#allocation3], %s214
          %s216 = sshll.u32 [#allocation2], 4
          %s217 = int_to_ptr.vmem [resolvable:$true] %s216
          %222 = dma.hbm_to_vmem [thread:$0]  %s1, 512, %s217, [#allocation3], 128, 128, 8
        $region16: #{tpu_custom_call.1} parent=11 // pred_fallthru
          _
        // Predicated region
        $region17: #{tpu_custom_call.1} parent=11 // pred_check
          %p223 = pneg %p85
        $region18: #{tpu_custom_call.1} parent=11 // pred_check_branch
          %225 = sbr.rel (%p223) target = $region20
        $region19: #{tpu_custom_call.1} parent=11 // pred_region
          _
        $region20: #{tpu_custom_call.1} parent=11 // pred_fallthru
          _
        // Predicated region
        $region21: #{tpu_custom_call.1} parent=11 // pred_check
          %p226 = pneg %p106
        $region22: #{tpu_custom_call.1} parent=11 // pred_check_branch
          %228 = sbr.rel (%p226) target = $region24
        $region23: #{tpu_custom_call.1} parent=11 // pred_region
          _
        $region24: #{tpu_custom_call.1} parent=11 // pred_fallthru
          _
        // Predicated region
        $region25: #{tpu_custom_call.1} parent=11 // pred_check
          %p229 = pneg %p127
        $region26: #{tpu_custom_call.1} parent=11 // pred_check_branch
          %231 = sbr.rel (%p229) target = $region28
        $region27: #{tpu_custom_call.1} parent=11 // pred_region
          _
        $region28: #{tpu_custom_call.1} parent=11 // pred_fallthru
          _
        // Predicated region
        $region29: #{tpu_custom_call.1} parent=11 // pred_check
          %p232 = pneg %p148
        $region30: #{tpu_custom_call.1} parent=11 // pred_check_branch
          %234 = sbr.rel (%p232) target = $region32
        $region31: #{tpu_custom_call.1} parent=11 // pred_region
          _
        $region32: #{tpu_custom_call.1} parent=11 // pred_fallthru
          _
        // Predicated region
        $region33: #{tpu_custom_call.1} parent=11 // pred_check
          %p235 = pneg %p169
        $region34: #{tpu_custom_call.1} parent=11 // pred_check_branch
          %237 = sbr.rel (%p235) target = $region36
        $region35: #{tpu_custom_call.1} parent=11 // pred_region
          _
        $region36: #{tpu_custom_call.1} parent=11 // pred_fallthru
          _
      $region12: #{tpu_custom_call.1} parent=5 // pred_fallthru
        _
      %p238 = scmp.lt.s32.totalorder %s17, 2
      // Predicated region
      $region37: #{tpu_custom_call.1} parent=5 // pred_check
        %p239 = pneg %p238
      $region38: #{tpu_custom_call.1} parent=5 // pred_check_branch
        %241 = sbr.rel (%p239) target = $region40
      $region39: #{tpu_custom_call.1} parent=5 // pred_region
        // Predicated region
        $region41: #{tpu_custom_call.1} parent=39 // pred_check
          %p242 = pneg %p37
        $region42: #{tpu_custom_call.1} parent=39 // pred_check_branch
          %244 = sbr.rel (%p242) target = $region44
        $region43: #{tpu_custom_call.1} parent=39 // pred_region
          %p245 = scmp.lt.s32.totalorder %s17, 1
          %s246 = scalar_select %p245, %s17, 1
          %s247 = smul.addr %s246, 8
          %s248 = scalar_lea.vmem %s0, %s247
        $region44: #{tpu_custom_call.1} parent=39 // pred_fallthru
          _
      $region40: #{tpu_custom_call.1} parent=5 // pred_fallthru
        _
      %p249 = scmp.le.s32.totalorder 1, %s17
      %p250 = scmp.lt.s32.totalorder %s17, 3
      %p251 = pnand %p249, %p250
      %p252 = pneg %p251
      // Predicated region
      $region45: #{tpu_custom_call.1} parent=5 // pred_check
        _
      $region46: #{tpu_custom_call.1} parent=5 // pred_check_branch
        %254 = sbr.rel (%p251) target = $region48
      $region47: #{tpu_custom_call.1} parent=5 // pred_region
        %s255 = ssub.s32 %s17, 1
        // Predicated region
        $region49: #{tpu_custom_call.1} parent=47 // pred_check
          %p256 = pneg %p64
        $region50: #{tpu_custom_call.1} parent=47 // pred_check_branch
          %258 = sbr.rel (%p256) target = $region52
        $region51: #{tpu_custom_call.1} parent=47 // pred_region
          %259 = dma.done [#allocation3], 512
        $region52: #{tpu_custom_call.1} parent=47 // pred_fallthru
          _
        %p260 = scmp.lt.s32.totalorder %s22, 1
        %s261 = scalar_select %p260, %s22, 1
        %s262 = smul.addr %s261, 8
        %s263 = scalar_lea.vmem %s0, %s262
        %p264 = pneg %p43
        %p265 = pneg %p40
        %p266 = pneg %p64
        %p267 = pneg %p61
        %p268 = pneg %p85
        %p269 = pneg %p82
        %p270 = pneg %p106
        %p271 = pneg %p103
        %p272 = pneg %p127
        %p273 = pneg %p124
        %p274 = pneg %p148
        %p275 = pneg %p145
        %p276 = pneg %p169
        %p277 = pneg %p166
        %p278 = pneg %p195
        %p279 = pneg %p192
        %s280 = sand.u32 %s182, 1
        %s281 = scalar_lea.sflag [#allocation4], %s280
        %s282 = sand.u32 %s182, 1
        %s283 = smul.addr %s282, 8
        %s284 = scalar_lea.vmem [#allocation5], %s283
        %p285 = scmp.lt.s32.totalorder %s22, 1
        %s286 = scalar_select %p285, %s22, 1
        %s287 = smul.addr %s286, 8
        %s288 = scalar_lea.vmem %s0, %s287
        %v289 = vld [vmem:[%s288] sm:$0xff]
        %v290 = vld [vmem:[#allocation2] sm:$0xff]
        %v291 = vld [vmem:[#allocation2 + $0x8] sm:$0xff]
        %v292 = vld [vmem:[#allocation2 + $0x10] sm:$0xff]
        %v293 = vld [vmem:[#allocation2 + $0x18] sm:$0xff]
        %v294 = vld [vmem:[%s3] sm:$0xff]
        %v295 = vld [vmem:[%s3 + $0x8] sm:$0xff]
        %v296 = vld [vmem:[%s3 + $0x10] sm:$0xff]
        %v297 = vld [vmem:[%s3 + $0x18] sm:$0xff]
        %v298 = vld [vmem:[%s3 + $0x20] sm:$0xff]
        %v299 = vld [vmem:[%s3 + $0x28] sm:$0xff]
        %v300 = vld [vmem:[%s3 + $0x30] sm:$0xff]
        %v301 = vld [vmem:[%s3 + $0x38] sm:$0xff]
        %v302 = vld [vmem:[%s3 + $0x40] sm:$0xff]
        %v303 = vld [vmem:[%s3 + $0x48] sm:$0xff]
        %v304 = vld [vmem:[%s3 + $0x50] sm:$0xff]
        %v305 = vld [vmem:[%s3 + $0x58] sm:$0xff]
        %v306 = vld [vmem:[%s3 + $0x60] sm:$0xff]
        %v307 = vld [vmem:[%s3 + $0x68] sm:$0xff]
        %v308 = vld [vmem:[%s3 + $0x70] sm:$0xff]
        %v309 = vld [vmem:[%s3 + $0x78] sm:$0xff]
        %v310 = vld [vmem:[%s5] sm:$0xff]
        %v311 = vld [vmem:[%s5 + $0x8] sm:$0xff]
        %v312 = vld [vmem:[%s5 + $0x10] sm:$0xff]
        %v313 = vld [vmem:[%s5 + $0x18] sm:$0xff]
        %v314 = vld [vmem:[%s5 + $0x20] sm:$0xff]
        %v315 = vld [vmem:[%s5 + $0x28] sm:$0xff]
        %v316 = vld [vmem:[%s5 + $0x30] sm:$0xff]
        %v317 = vld [vmem:[%s5 + $0x38] sm:$0xff]
        %v318 = vld [vmem:[%s5 + $0x40] sm:$0xff]
        %v319 = vld [vmem:[%s5 + $0x48] sm:$0xff]
        %v320 = vld [vmem:[%s5 + $0x50] sm:$0xff]
        %v321 = vld [vmem:[%s5 + $0x58] sm:$0xff]
        %v322 = vld [vmem:[%s5 + $0x60] sm:$0xff]
        %v323 = vld [vmem:[%s5 + $0x68] sm:$0xff]
        %v324 = vld [vmem:[%s5 + $0x70] sm:$0xff]
        %v325 = vld [vmem:[%s5 + $0x78] sm:$0xff]
        %v326 = vld [vmem:[%s2] sm:$0x1]
        %v328 = vlaneseq
        %v329 = vshrl.u32 %v328, 7
        %v330 = vsub.s32 0, %v329
        %v331 = vrot.slane %v326, %v330
        %vm333 = vcmask 261120
        %v335 = vsel %vm333, %v289, 0
        %337 = vmatprep.subr.mxu0 0.0
        %338 = vmatpush1.msra.mxu0 0.0
        %339 = vmatprep.subr.mxu0 0.0
        %340 = vmatpush1.msra.mxu0 0.0
        %341 = vmatprep.subr.mxu0 0.0
        %342 = vmatpush1.msra.mxu0 0.0
        %343 = vmatprep.subr.mxu0 0.0
        %344 = vmatpush1.msra.mxu0 0.0
        %345 = vmatprep.subr.mxu0 0.0
        %346 = vmatpush1.msra.mxu0 0.0
        %347 = vmatprep.subr.mxu0 0.0
        %348 = vmatpush1.msra.mxu0 0.0
        %349 = vmatprep.subr.mxu0 0.0
        %350 = vmatpush1.msra.mxu0 0.0
        %351 = vmatprep.subr.mxu0 0.0
        %352 = vmatpush1.msra.mxu0 0.0
        %353 = vmatprep.subr.mxu0 0.0
        %354 = vmatpush1.msra.mxu0 0.0
        %355 = vmatprep.subr.mxu0 0.0
        %356 = vmatpush1.msra.mxu0 0.0
        %357 = vmatprep.subr.mxu0 0.0
        %358 = vmatpush1.msra.mxu0 0.0
        %359 = vmatprep.subr.mxu0 0.0
        %360 = vmatpush1.msra.mxu0 0.0
        %361 = vmatprep.subr.mxu0 0.0
        %362 = vmatpush1.msra.mxu0 %v293
        %363 = vmatprep.subr.mxu0 0.0
        %364 = vmatpush1.msra.mxu0 %v292
        %365 = vmatprep.subr.mxu0 0.0
        %366 = vmatpush1.msra.mxu0 %v291
        %367 = vmatprep.subr.mxu0 0.0
        %368 = vmatpush1.msra.mxu0 %v290
        %369 = vmatprep.subr.mxu0 0.0
        %370 = vmatpush2.msra.mxu0 0.0
        %371 = vmatprep.subr.mxu0 0.0
        %372 = vmatpush2.msra.mxu0 0.0
        %373 = vmatprep.subr.mxu0 0.0
        %374 = vmatpush2.msra.mxu0 0.0
        %375 = vmatprep.subr.mxu0 0.0
        %376 = vmatpush2.msra.mxu0 0.0
        %377 = vmatprep.subr.mxu0 0.0
        %378 = vmatpush2.msra.mxu0 0.0
        %379 = vmatprep.subr.mxu0 0.0
        %380 = vmatpush2.msra.mxu0 0.0
        %381 = vmatprep.subr.mxu0 0.0
        %382 = vmatpush2.msra.mxu0 0.0
        %383 = vmatprep.subr.mxu0 0.0
        %384 = vmatpush2.msra.mxu0 0.0
        %385 = vmatprep.subr.mxu0 0.0
        %386 = vmatpush2.msra.mxu0 0.0
        %387 = vmatprep.subr.mxu0 0.0
        %388 = vmatpush2.msra.mxu0 0.0
        %389 = vmatprep.subr.mxu0 0.0
        %390 = vmatpush2.msra.mxu0 0.0
        %391 = vmatprep.subr.mxu0 0.0
        %392 = vmatpush2.msra.mxu0 0.0
        %393 = vmatprep.subr.mxu0 0.0
        %394 = vmatpush2.msra.mxu0 0.0
        %395 = vmatprep.subr.mxu0 0.0
        %396 = vmatpush2.msra.mxu0 0.0
        %397 = vmatprep.subr.mxu0 0.0
        %398 = vmatpush2.msra.mxu0 0.0
        %399 = vmatprep.subr.mxu0 0.0
        %400 = vmatpush2.msra.mxu0 0.0
        %401 = vmatprep.mubr.f32.mxu0 0.0
        %402 = vmatmul.mubr.f32.gmra.mxu0 %v335
        %v403 = vpop.f32.mrf.mxu0
        %v404 = vadd.f32 %v331, %v403
        %v405 = vpop.f32.mrf.mxu0
        %406 = vdwg.mxu0
        %v407 = vmax.f32 %v404, 0.0
        %v408 = vld [vmem:[%s4] sm:$0x1]
        %v410 = vlaneseq
        %v411 = vshrl.u32 %v410, 7
        %v412 = vsub.s32 0, %v411
        %v413 = vrot.slane %v408, %v412
        %415 = vmatprep.subr.mxu0 0.0
        %416 = vmatpush1.msra.mxu0 %v309
        %417 = vmatprep.subr.mxu0 0.0
        %418 = vmatpush1.msra.mxu0 %v308
        %419 = vmatprep.subr.mxu0 0.0
        %420 = vmatpush1.msra.mxu0 %v307
        %421 = vmatprep.subr.mxu0 0.0
        %422 = vmatpush1.msra.mxu0 %v306
        %423 = vmatprep.subr.mxu0 0.0
        %424 = vmatpush1.msra.mxu0 %v305
        %425 = vmatprep.subr.mxu0 0.0
        %426 = vmatpush1.msra.mxu0 %v304
        %427 = vmatprep.subr.mxu0 0.0
        %428 = vmatpush1.msra.mxu0 %v303
        %429 = vmatprep.subr.mxu0 0.0
        %430 = vmatpush1.msra.mxu0 %v302
        %431 = vmatprep.subr.mxu0 0.0
        %432 = vmatpush1.msra.mxu0 %v301
        %433 = vmatprep.subr.mxu0 0.0
        %434 = vmatpush1.msra.mxu0 %v300
        %435 = vmatprep.subr.mxu0 0.0
        %436 = vmatpush1.msra.mxu0 %v299
        %437 = vmatprep.subr.mxu0 0.0
        %438 = vmatpush1.msra.mxu0 %v298
        %439 = vmatprep.subr.mxu0 0.0
        %440 = vmatpush1.msra.mxu0 %v297
        %441 = vmatprep.subr.mxu0 0.0
        %442 = vmatpush1.msra.mxu0 %v296
        %443 = vmatprep.subr.mxu0 0.0
        %444 = vmatpush1.msra.mxu0 %v295
        %445 = vmatprep.subr.mxu0 0.0
        %446 = vmatpush1.msra.mxu0 %v294
        %447 = vmatprep.subr.mxu0 0.0
        %448 = vmatpush2.msra.mxu0 0.0
        %449 = vmatprep.subr.mxu0 0.0
        %450 = vmatpush2.msra.mxu0 0.0
        %451 = vmatprep.subr.mxu0 0.0
        %452 = vmatpush2.msra.mxu0 0.0
        %453 = vmatprep.subr.mxu0 0.0
        %454 = vmatpush2.msra.mxu0 0.0
        %455 = vmatprep.subr.mxu0 0.0
        %456 = vmatpush2.msra.mxu0 0.0
        %457 = vmatprep.subr.mxu0 0.0
        %458 = vmatpush2.msra.mxu0 0.0
        %459 = vmatprep.subr.mxu0 0.0
        %460 = vmatpush2.msra.mxu0 0.0
        %461 = vmatprep.subr.mxu0 0.0
        %462 = vmatpush2.msra.mxu0 0.0
        %463 = vmatprep.subr.mxu0 0.0
        %464 = vmatpush2.msra.mxu0 0.0
        %465 = vmatprep.subr.mxu0 0.0
        %466 = vmatpush2.msra.mxu0 0.0
        %467 = vmatprep.subr.mxu0 0.0
        %468 = vmatpush2.msra.mxu0 0.0
        %469 = vmatprep.subr.mxu0 0.0
        %470 = vmatpush2.msra.mxu0 0.0
        %471 = vmatprep.subr.mxu0 0.0
        %472 = vmatpush2.msra.mxu0 0.0
        %473 = vmatprep.subr.mxu0 0.0
        %474 = vmatpush2.msra.mxu0 0.0
        %475 = vmatprep.subr.mxu0 0.0
        %476 = vmatpush2.msra.mxu0 0.0
        %477 = vmatprep.subr.mxu0 0.0
        %478 = vmatpush2.msra.mxu0 0.0
        %479 = vmatprep.mubr.f32.mxu0 0.0
        %480 = vmatmul.mubr.f32.gmra.mxu0 %v407
        %v481 = vpop.f32.mrf.mxu0
        %v482 = vadd.f32 %v413, %v481
        %v483 = vpop.f32.mrf.mxu0
        %484 = vdwg.mxu0
        %v485 = vmax.f32 %v482, 0.0
        %v486 = vld [vmem:[%s6] sm:$0x1]
        %v488 = vlaneseq
        %v489 = vshrl.u32 %v488, 7
        %v490 = vsub.s32 0, %v489
        %v491 = vrot.slane %v486, %v490
        %493 = vmatprep.subr.mxu0 0.0
        %494 = vmatpush1.msra.mxu0 %v325
        %495 = vmatprep.subr.mxu0 0.0
        %496 = vmatpush1.msra.mxu0 %v324
        %497 = vmatprep.subr.mxu0 0.0
        %498 = vmatpush1.msra.mxu0 %v323
        %499 = vmatprep.subr.mxu0 0.0
        %500 = vmatpush1.msra.mxu0 %v322
        %501 = vmatprep.subr.mxu0 0.0
        %502 = vmatpush1.msra.mxu0 %v321
        %503 = vmatprep.subr.mxu0 0.0
        %504 = vmatpush1.msra.mxu0 %v320
        %505 = vmatprep.subr.mxu0 0.0
        %506 = vmatpush1.msra.mxu0 %v319
        %507 = vmatprep.subr.mxu0 0.0
        %508 = vmatpush1.msra.mxu0 %v318
        %509 = vmatprep.subr.mxu0 0.0
        %510 = vmatpush1.msra.mxu0 %v317
        %511 = vmatprep.subr.mxu0 0.0
        %512 = vmatpush1.msra.mxu0 %v316
        %513 = vmatprep.subr.mxu0 0.0
        %514 = vmatpush1.msra.mxu0 %v315
        %515 = vmatprep.subr.mxu0 0.0
        %516 = vmatpush1.msra.mxu0 %v314
        %517 = vmatprep.subr.mxu0 0.0
        %518 = vmatpush1.msra.mxu0 %v313
        %519 = vmatprep.subr.mxu0 0.0
        %520 = vmatpush1.msra.mxu0 %v312
        %521 = vmatprep.subr.mxu0 0.0
        %522 = vmatpush1.msra.mxu0 %v311
        %523 = vmatprep.subr.mxu0 0.0
        %524 = vmatpush1.msra.mxu0 %v310
        %525 = vmatprep.subr.mxu0 0.0
        %526 = vmatpush2.msra.mxu0 0.0
        %527 = vmatprep.subr.mxu0 0.0
        %528 = vmatpush2.msra.mxu0 0.0
        %529 = vmatprep.subr.mxu0 0.0
        %530 = vmatpush2.msra.mxu0 0.0
        %531 = vmatprep.subr.mxu0 0.0
        %532 = vmatpush2.msra.mxu0 0.0
        %533 = vmatprep.subr.mxu0 0.0
        %534 = vmatpush2.msra.mxu0 0.0
        %535 = vmatprep.subr.mxu0 0.0
        %536 = vmatpush2.msra.mxu0 0.0
        %537 = vmatprep.subr.mxu0 0.0
        %538 = vmatpush2.msra.mxu0 0.0
        %539 = vmatprep.subr.mxu0 0.0
        %540 = vmatpush2.msra.mxu0 0.0
        %541 = vmatprep.subr.mxu0 0.0
        %542 = vmatpush2.msra.mxu0 0.0
        %543 = vmatprep.subr.mxu0 0.0
        %544 = vmatpush2.msra.mxu0 0.0
        %545 = vmatprep.subr.mxu0 0.0
        %546 = vmatpush2.msra.mxu0 0.0
        %547 = vmatprep.subr.mxu0 0.0
        %548 = vmatpush2.msra.mxu0 0.0
        %549 = vmatprep.subr.mxu0 0.0
        %550 = vmatpush2.msra.mxu0 0.0
        %551 = vmatprep.subr.mxu0 0.0
        %552 = vmatpush2.msra.mxu0 0.0
        %553 = vmatprep.subr.mxu0 0.0
        %554 = vmatpush2.msra.mxu0 0.0
        %555 = vmatprep.subr.mxu0 0.0
        %556 = vmatpush2.msra.mxu0 0.0
        %557 = vmatprep.mubr.f32.mxu0 0.0
        %558 = vmatmul.mubr.f32.gmra.mxu0 %v485
        %v559 = vpop.f32.mrf.mxu0
        %v560 = vadd.f32 %v491, %v559
        %v561 = vpop.f32.mrf.mxu0
        %562 = vdwg.mxu0
        %v563 = vmax.f32 %v560, -1.0
        %v564 = vmin.f32 %v563, 1.0
        %vm565 = vcmask 130048
        %566 = vst.msk [vmem:[%s284] sm:$0xff] %vm565, %v564
        %s567 = sand.u32 %s182, 1
        %s568 = scalar_lea.sflag [#allocation4], %s567
        %s569 = sand.u32 %s182, 1
        %s570 = smul.addr %s569, 8
        %s571 = scalar_lea.vmem [#allocation5], %s570
        // Predicated region
        $region53: #{tpu_custom_call.1} parent=47 // pred_check
          %p572 = pneg %p192
        $region54: #{tpu_custom_call.1} parent=47 // pred_check_branch
          %574 = sbr.rel (%p572) target = $region56
        $region55: #{tpu_custom_call.1} parent=47 // pred_region
          %s576 = ssub.s32 128, 128
          %577 = vsyncadd %s568, %s576
          %s578 = smul.addr %s22, 128
          %s579 = scalar_lea.hbm %s7, %s578
          %s581 = sshll.u32 %s571, 4
          %s582 = int_to_ptr.vmem [resolvable:$true] %s581
          %584 = dma.vmem_to_hbm [thread:$0]  %s582, 128, %s579, %s568
        $region56: #{tpu_custom_call.1} parent=47 // pred_fallthru
          _
      $region48: #{tpu_custom_call.1} parent=5 // pred_fallthru
        _
      %p585 = scmp.le.s32.totalorder 2, %s17
      // Predicated region
      $region57: #{tpu_custom_call.1} parent=5 // pred_check
        %p586 = pneg %p585
      $region58: #{tpu_custom_call.1} parent=5 // pred_check_branch
        %588 = sbr.rel (%p586) target = $region60
      $region59: #{tpu_custom_call.1} parent=5 // pred_region
        %s589 = ssub.s32 %s17, 2
        // Predicated region
        $region61: #{tpu_custom_call.1} parent=59 // pred_check
          %p590 = pneg %p198
        $region62: #{tpu_custom_call.1} parent=59 // pred_check_branch
          %592 = sbr.rel (%p590) target = $region64
        $region63: #{tpu_custom_call.1} parent=59 // pred_region
          %s593 = sand.u32 %s183, 1
          %s594 = scalar_lea.sflag [#allocation4], %s593
          %s595 = sand.u32 %s183, 1
          %s596 = smul.addr %s595, 8
          %s597 = scalar_lea.vmem [#allocation5], %s596
          %598 = dma.done %s594, 128
        $region64: #{tpu_custom_call.1} parent=59 // pred_fallthru
          _
      $region60: #{tpu_custom_call.1} parent=5 // pred_fallthru
        _
    $region6: #{tpu_custom_call.1} parent=1 // loop_footer
      %s21 = sadd.s32 1, %s17
    $region7: #{tpu_custom_call.1} parent=1 // loop_footer_branch
      %16 = sbr.rel target = $region3
    $region8: #{tpu_custom_call.1} parent=1 // loop_exit
      _
    %599 = vsyncpa [#allocation3], 1
    %s600 = scalar_lea.sflag [#allocation3], 1
    %601 = vsyncpa %s600, 1
    %602 = vsyncpa [#allocation4], 1
    %s603 = scalar_lea.sflag [#allocation4], 1
    %604 = vsyncpa %s603, 1

</llo_original>
